<compile_context>
chip_gen: v7x
topology: tpu7x:2x2x1
jax: 0.10.0
libtpu: 0.0.40
codegen_flags: <defaults>
</compile_context>

<pallas_src>
import jax
import jax.numpy as jnp
from jax.experimental import pallas as pl
from jax.experimental.pallas import tpu as pltpu

_LANE = 128
_SUBLANE = 8


def _round_up(x, m):
    return ((x + m - 1) // m) * m


def _vmem_capacity_bytes():
    try:
        return int(pltpu.get_tpu_info().vmem_capacity_bytes)
    except Exception:
        return 64 * 1024 * 1024  # conservative (v7x-sized) fallback


def _mix_kernel(x_ref, w_ref, o_ref):
    """Complex mode-mixing over Ci with modes on the lane axis.

    x_ref: (2, B, Ci, tm)   [0]=real, [1]=imag
    w_ref: (2, Ci, Co, tm)
    o_ref: (2, B, Co, tm)
    """
    _, B, Ci, tm = x_ref.shape
    Co = w_ref.shape[2]

    xr = x_ref[0]            # (B, Ci, tm)
    xi = x_ref[1]
    wr = w_ref[0]            # (Ci, Co, tm)
    wi = w_ref[1]

    acc_r = jnp.zeros((B, Co, tm), jnp.float32)
    acc_i = jnp.zeros((B, Co, tm), jnp.float32)

    # Contraction over input channels: out[b,o,m] = sum_i x[b,i,m] * w[i,o,m]
    # (complex).  Per-i broadcast-FMA on (B,Co,tm) slabs — pure VPU work, lanes
    # fully dense; live state stays O(B*Co*tm).
    for i in range(Ci):
        xr_i = xr[:, i : i + 1, :]    # (B, 1, tm)
        xi_i = xi[:, i : i + 1, :]
        wr_i = wr[i : i + 1]          # (1, Co, tm)
        wi_i = wi[i : i + 1]
        acc_r = acc_r + xr_i * wr_i - xi_i * wi_i
        acc_i = acc_i + xr_i * wi_i + xi_i * wr_i

    o_ref[0] = acc_r
    o_ref[1] = acc_i


def compl_mul2d_pallas(x_ri, w_ri):
    """x_ri: (2, B, Ci, M) f32 ; w_ri: (2, Ci, Co, M) f32 -> (2, B, Co, M) f32."""
    _, B, Ci, M = x_ri.shape
    Co = w_ri.shape[2]

    # ---- tile sizing with (8,128)-padded VMEM accounting --------------------
    ci_pad = _round_up(Ci, _SUBLANE)
    co_pad = _round_up(Co, _SUBLANE)
    # f32 bytes per 128-lane column, per stream, double-buffered.
    bytes_per_col = 4 * _LANE * 2 * (
        2 * B * ci_pad        # x block (real+imag stacked)
        + 2 * Ci * co_pad     # w block
        + 2 * B * co_pad      # out block
    )

    vmem_cap = _vmem_capacity_bytes()
    budget = vmem_cap // 2                      # headroom for pipeline/scratch
    max_cols = max(1, budget // bytes_per_col)

    Mp = _round_up(M, _LANE)
    tm = min(Mp, max_cols * _LANE)
    # Keep >= 2 grid steps when M allows so the "parallel" mode axis actually
    # shards across v7x's two TensorCores.
    if tm >= Mp and Mp >= 2 * _LANE:
        tm = _round_up(Mp // 2, _LANE)
    tm = max(_LANE, (tm // _LANE) * _LANE)

    grid_n = pl.cdiv(Mp, tm)
    Mp = grid_n * tm

    if Mp != M:
        pad = ((0, 0), (0, 0), (0, 0), (0, Mp - M))
        x_ri = jnp.pad(x_ri, pad)
        w_ri = jnp.pad(w_ri, pad)

    vmem_limit = min(int(vmem_cap * 0.75), vmem_cap - (8 << 20))

    out_ri = pl.pallas_call(
        _mix_kernel,
        out_shape=jax.ShapeDtypeStruct((2, B, Co, Mp), jnp.float32),
        grid_spec=pltpu.PrefetchScalarGridSpec(
            num_scalar_prefetch=0,
            grid=(grid_n,),
            in_specs=[
                pl.BlockSpec((2, B, Ci, tm), lambda m: (0, 0, 0, m)),
                pl.BlockSpec((2, Ci, Co, tm), lambda m: (0, 0, 0, m)),
            ],
            out_specs=pl.BlockSpec((2, B, Co, tm), lambda m: (0, 0, 0, m)),
        ),
        compiler_params=pltpu.CompilerParams(
            dimension_semantics=("parallel",),   # mode tiles are independent
            vmem_limit_bytes=vmem_limit,
        ),
    )(x_ri, w_ri)

    return out_ri[..., :M]


def spectral_conv2d(x, wr, wi, modes1, modes2):
    """Forward pass matching SpectralConv2d.forward.

    x  : (B, Cin, H, W) float32
    wr : (Cin, Cout, modes1, modes2) float32  (real part of weights1)
    wi : (Cin, Cout, modes1, modes2) float32  (imag part of weights1)
    returns (B, Cout, H, W) float32
    """
    B, Ci, H, W = x.shape
    Co = wr.shape[1]
    M = modes1 * modes2
    Wf = W // 2 + 1

    # FFT (glue, stays in XLA).
    x_ft = jnp.fft.rfft2(x, norm="ortho")                      # (B, Ci, H, Wf) c64
    x_ft_trunc = x_ft[:, :, :modes1, :modes2]                  # (B, Ci, m1, m2)

    # Lane-dense (modes-last) layout — plain reshapes, no transposes.
    xr = jnp.real(x_ft_trunc).astype(jnp.float32).reshape(B, Ci, M)
    xi = jnp.imag(x_ft_trunc).astype(jnp.float32).reshape(B, Ci, M)
    x_ri = jnp.stack([xr, xi], axis=0)                         # (2, B, Ci, M)

    w_ri = jnp.stack(
        [wr.astype(jnp.float32).reshape(Ci, Co, M),
         wi.astype(jnp.float32).reshape(Ci, Co, M)],
        axis=0,
    )                                                          # (2, Ci, Co, M)

    # Hot path: complex einsum 'bixy,ioxy->boxy' inside Pallas (lane-dense).
    out_ri = compl_mul2d_pallas(x_ri, w_ri)                    # (2, B, Co, M)

    out_c = (out_ri[0] + 1j * out_ri[1]).astype(jnp.complex64)
    out_ft_trunc = out_c.reshape(B, Co, modes1, modes2)

    # Build the full spectrum by zero-padding the kept corner.
    out_ft = jnp.pad(
        out_ft_trunc,
        ((0, 0), (0, 0), (0, H - modes1), (0, Wf - modes2)),
    )

    # Inverse FFT back to physical space (glue, stays in XLA).
    out = jnp.fft.irfft2(out_ft, s=(H, W), norm="ortho")
    return out.astype(jnp.float32)


def _reference(x, wr, wi, modes1, modes2):
    """Pure-JAX reference for correctness check (mirrors the PyTorch module)."""
    B, Ci, H, W = x.shape
    Co = wr.shape[1]
    w = (wr + 1j * wi).astype(jnp.complex64)
    x_ft = jnp.fft.rfft2(x, norm="ortho")
    out_ft = jnp.zeros((B, Co, H, W // 2 + 1), dtype=jnp.complex64)
    mixed = jnp.einsum("bixy,ioxy->boxy", x_ft[:, :, :modes1, :modes2], w)
    out_ft = out_ft.at[:, :, :modes1, :modes2].set(mixed)
    return jnp.fft.irfft2(out_ft, s=(H, W), norm="ortho").astype(jnp.float32)


if __name__ == "__main__":
    # Small deterministic config.
    B, Cin, Cout = 2, 4, 4
    H, W = 16, 16
    modes1, modes2 = 6, 6

    key = jax.random.PRNGKey(0)
    kx, kwr, kwi = jax.random.split(key, 3)

    x = jax.random.normal(kx, (B, Cin, H, W), dtype=jnp.float32)

    # torch.rand(..., dtype=cfloat) -> uniform[0,1) real and imag; scaled by 1/(Cin*Cout).
    scale = 1.0 / (Cin * Cout)
    wr = scale * jax.random.uniform(kwr, (Cin, Cout, modes1, modes2), dtype=jnp.float32)
    wi = scale * jax.random.uniform(kwi, (Cin, Cout, modes1, modes2), dtype=jnp.float32)

    out = spectral_conv2d(x, wr, wi, modes1, modes2)
    out = jax.block_until_ready(out)

    ref = jax.block_until_ready(_reference(x, wr, wi, modes1, modes2))
    assert out.shape == (B, Cout, H, W)
    assert jnp.allclose(out, ref, atol=1e-5, rtol=1e-5)

    print("KERNEL_OK")
</pallas_src>

<mosaic_0001>
module attributes {stable_mosaic.version = 11 : i64} {
  func.func @_mix_kernel(%arg0: i32, %arg1: memref<2x2x4x128xf32, #tpu.memory_space<vmem>>, %arg2: memref<2x4x4x128xf32, #tpu.memory_space<vmem>>, %arg3: memref<2x2x4x128xf32, #tpu.memory_space<vmem>>) attributes {dimension_semantics = [#tpu.dimension_semantics<parallel>], iteration_bounds = array<i64: 1>, scalar_prefetch = 0 : i64, scratch_operands = 0 : i64, tpu.core_type = #tpu.core_type<tc>, window_params = [{transform_indices = @transform_0, window_bounds = array<i64: 2, 2, 4, 128>}, {transform_indices = @transform_1, window_bounds = array<i64: 2, 4, 4, 128>}, {transform_indices = @transform_2, window_bounds = array<i64: 2, 2, 4, 128>}]} {
    %c0 = arith.constant 0 : index
    %c0_0 = arith.constant 0 : index
    %c0_1 = arith.constant 0 : index
    %c0_2 = arith.constant 0 : index
    %0 = vector.load %arg1[%c0, %c0_0, %c0_1, %c0_2] : memref<2x2x4x128xf32, #tpu.memory_space<vmem>>, vector<1x2x4x128xf32>
    %1 = vector.shape_cast %0 : vector<1x2x4x128xf32> to vector<2x4x128xf32>
    %c1 = arith.constant 1 : index
    %c0_3 = arith.constant 0 : index
    %c0_4 = arith.constant 0 : index
    %c0_5 = arith.constant 0 : index
    %2 = vector.load %arg1[%c1, %c0_3, %c0_4, %c0_5] : memref<2x2x4x128xf32, #tpu.memory_space<vmem>>, vector<1x2x4x128xf32>
    %3 = vector.shape_cast %2 : vector<1x2x4x128xf32> to vector<2x4x128xf32>
    %c0_6 = arith.constant 0 : index
    %c0_7 = arith.constant 0 : index
    %c0_8 = arith.constant 0 : index
    %c0_9 = arith.constant 0 : index
    %4 = vector.load %arg2[%c0_6, %c0_7, %c0_8, %c0_9] : memref<2x4x4x128xf32, #tpu.memory_space<vmem>>, vector<1x4x4x128xf32>
    %5 = vector.shape_cast %4 : vector<1x4x4x128xf32> to vector<4x4x128xf32>
    %c1_10 = arith.constant 1 : index
    %c0_11 = arith.constant 0 : index
    %c0_12 = arith.constant 0 : index
    %c0_13 = arith.constant 0 : index
    %6 = vector.load %arg2[%c1_10, %c0_11, %c0_12, %c0_13] : memref<2x4x4x128xf32, #tpu.memory_space<vmem>>, vector<1x4x4x128xf32>
    %7 = vector.shape_cast %6 : vector<1x4x4x128xf32> to vector<4x4x128xf32>
    %cst = arith.constant 0.000000e+00 : f32
    %8 = vector.broadcast %cst : f32 to vector<2x4x128xf32>
    %cst_14 = arith.constant 0.000000e+00 : f32
    %9 = vector.broadcast %cst_14 : f32 to vector<2x4x128xf32>
    %10 = vector.extract_strided_slice %1 {offsets = [0, 0, 0], sizes = [2, 1, 128], strides = [1, 1, 1]} : vector<2x4x128xf32> to vector<2x1x128xf32>
    %11 = vector.extract_strided_slice %3 {offsets = [0, 0, 0], sizes = [2, 1, 128], strides = [1, 1, 1]} : vector<2x4x128xf32> to vector<2x1x128xf32>
    %12 = vector.extract_strided_slice %5 {offsets = [0, 0, 0], sizes = [1, 4, 128], strides = [1, 1, 1]} : vector<4x4x128xf32> to vector<1x4x128xf32>
    %13 = vector.extract_strided_slice %7 {offsets = [0, 0, 0], sizes = [1, 4, 128], strides = [1, 1, 1]} : vector<4x4x128xf32> to vector<1x4x128xf32>
    %14 = vector.broadcast %10 : vector<2x1x128xf32> to vector<2x4x128xf32>
    %15 = vector.broadcast %12 : vector<1x4x128xf32> to vector<2x4x128xf32>
    %16 = arith.mulf %14, %15 : vector<2x4x128xf32>
    %17 = arith.addf %8, %16 : vector<2x4x128xf32>
    %18 = vector.broadcast %11 : vector<2x1x128xf32> to vector<2x4x128xf32>
    %19 = vector.broadcast %13 : vector<1x4x128xf32> to vector<2x4x128xf32>
    %20 = arith.mulf %18, %19 : vector<2x4x128xf32>
    %21 = arith.subf %17, %20 : vector<2x4x128xf32>
    %22 = vector.broadcast %10 : vector<2x1x128xf32> to vector<2x4x128xf32>
    %23 = vector.broadcast %13 : vector<1x4x128xf32> to vector<2x4x128xf32>
    %24 = arith.mulf %22, %23 : vector<2x4x128xf32>
    %25 = arith.addf %9, %24 : vector<2x4x128xf32>
    %26 = vector.broadcast %11 : vector<2x1x128xf32> to vector<2x4x128xf32>
    %27 = vector.broadcast %12 : vector<1x4x128xf32> to vector<2x4x128xf32>
    %28 = arith.mulf %26, %27 : vector<2x4x128xf32>
    %29 = arith.addf %25, %28 : vector<2x4x128xf32>
    %30 = vector.extract_strided_slice %1 {offsets = [0, 1, 0], sizes = [2, 1, 128], strides = [1, 1, 1]} : vector<2x4x128xf32> to vector<2x1x128xf32>
    %31 = vector.extract_strided_slice %3 {offsets = [0, 1, 0], sizes = [2, 1, 128], strides = [1, 1, 1]} : vector<2x4x128xf32> to vector<2x1x128xf32>
    %32 = vector.extract_strided_slice %5 {offsets = [1, 0, 0], sizes = [1, 4, 128], strides = [1, 1, 1]} : vector<4x4x128xf32> to vector<1x4x128xf32>
    %33 = vector.extract_strided_slice %7 {offsets = [1, 0, 0], sizes = [1, 4, 128], strides = [1, 1, 1]} : vector<4x4x128xf32> to vector<1x4x128xf32>
    %34 = vector.broadcast %30 : vector<2x1x128xf32> to vector<2x4x128xf32>
    %35 = vector.broadcast %32 : vector<1x4x128xf32> to vector<2x4x128xf32>
    %36 = arith.mulf %34, %35 : vector<2x4x128xf32>
    %37 = arith.addf %21, %36 : vector<2x4x128xf32>
    %38 = vector.broadcast %31 : vector<2x1x128xf32> to vector<2x4x128xf32>
    %39 = vector.broadcast %33 : vector<1x4x128xf32> to vector<2x4x128xf32>
    %40 = arith.mulf %38, %39 : vector<2x4x128xf32>
    %41 = arith.subf %37, %40 : vector<2x4x128xf32>
    %42 = vector.broadcast %30 : vector<2x1x128xf32> to vector<2x4x128xf32>
    %43 = vector.broadcast %33 : vector<1x4x128xf32> to vector<2x4x128xf32>
    %44 = arith.mulf %42, %43 : vector<2x4x128xf32>
    %45 = arith.addf %29, %44 : vector<2x4x128xf32>
    %46 = vector.broadcast %31 : vector<2x1x128xf32> to vector<2x4x128xf32>
    %47 = vector.broadcast %32 : vector<1x4x128xf32> to vector<2x4x128xf32>
    %48 = arith.mulf %46, %47 : vector<2x4x128xf32>
    %49 = arith.addf %45, %48 : vector<2x4x128xf32>
    %50 = vector.extract_strided_slice %1 {offsets = [0, 2, 0], sizes = [2, 1, 128], strides = [1, 1, 1]} : vector<2x4x128xf32> to vector<2x1x128xf32>
    %51 = vector.extract_strided_slice %3 {offsets = [0, 2, 0], sizes = [2, 1, 128], strides = [1, 1, 1]} : vector<2x4x128xf32> to vector<2x1x128xf32>
    %52 = vector.extract_strided_slice %5 {offsets = [2, 0, 0], sizes = [1, 4, 128], strides = [1, 1, 1]} : vector<4x4x128xf32> to vector<1x4x128xf32>
    %53 = vector.extract_strided_slice %7 {offsets = [2, 0, 0], sizes = [1, 4, 128], strides = [1, 1, 1]} : vector<4x4x128xf32> to vector<1x4x128xf32>
    %54 = vector.broadcast %50 : vector<2x1x128xf32> to vector<2x4x128xf32>
    %55 = vector.broadcast %52 : vector<1x4x128xf32> to vector<2x4x128xf32>
    %56 = arith.mulf %54, %55 : vector<2x4x128xf32>
    %57 = arith.addf %41, %56 : vector<2x4x128xf32>
    %58 = vector.broadcast %51 : vector<2x1x128xf32> to vector<2x4x128xf32>
    %59 = vector.broadcast %53 : vector<1x4x128xf32> to vector<2x4x128xf32>
    %60 = arith.mulf %58, %59 : vector<2x4x128xf32>
    %61 = arith.subf %57, %60 : vector<2x4x128xf32>
    %62 = vector.broadcast %50 : vector<2x1x128xf32> to vector<2x4x128xf32>
    %63 = vector.broadcast %53 : vector<1x4x128xf32> to vector<2x4x128xf32>
    %64 = arith.mulf %62, %63 : vector<2x4x128xf32>
    %65 = arith.addf %49, %64 : vector<2x4x128xf32>
    %66 = vector.broadcast %51 : vector<2x1x128xf32> to vector<2x4x128xf32>
    %67 = vector.broadcast %52 : vector<1x4x128xf32> to vector<2x4x128xf32>
    %68 = arith.mulf %66, %67 : vector<2x4x128xf32>
    %69 = arith.addf %65, %68 : vector<2x4x128xf32>
    %70 = vector.extract_strided_slice %1 {offsets = [0, 3, 0], sizes = [2, 1, 128], strides = [1, 1, 1]} : vector<2x4x128xf32> to vector<2x1x128xf32>
    %71 = vector.extract_strided_slice %3 {offsets = [0, 3, 0], sizes = [2, 1, 128], strides = [1, 1, 1]} : vector<2x4x128xf32> to vector<2x1x128xf32>
    %72 = vector.extract_strided_slice %5 {offsets = [3, 0, 0], sizes = [1, 4, 128], strides = [1, 1, 1]} : vector<4x4x128xf32> to vector<1x4x128xf32>
    %73 = vector.extract_strided_slice %7 {offsets = [3, 0, 0], sizes = [1, 4, 128], strides = [1, 1, 1]} : vector<4x4x128xf32> to vector<1x4x128xf32>
    %74 = vector.broadcast %70 : vector<2x1x128xf32> to vector<2x4x128xf32>
    %75 = vector.broadcast %72 : vector<1x4x128xf32> to vector<2x4x128xf32>
    %76 = arith.mulf %74, %75 : vector<2x4x128xf32>
    %77 = arith.addf %61, %76 : vector<2x4x128xf32>
    %78 = vector.broadcast %71 : vector<2x1x128xf32> to vector<2x4x128xf32>
    %79 = vector.broadcast %73 : vector<1x4x128xf32> to vector<2x4x128xf32>
    %80 = arith.mulf %78, %79 : vector<2x4x128xf32>
    %81 = arith.subf %77, %80 : vector<2x4x128xf32>
    %82 = vector.broadcast %70 : vector<2x1x128xf32> to vector<2x4x128xf32>
    %83 = vector.broadcast %73 : vector<1x4x128xf32> to vector<2x4x128xf32>
    %84 = arith.mulf %82, %83 : vector<2x4x128xf32>
    %85 = arith.addf %69, %84 : vector<2x4x128xf32>
    %86 = vector.broadcast %71 : vector<2x1x128xf32> to vector<2x4x128xf32>
    %87 = vector.broadcast %72 : vector<1x4x128xf32> to vector<2x4x128xf32>
    %88 = arith.mulf %86, %87 : vector<2x4x128xf32>
    %89 = arith.addf %85, %88 : vector<2x4x128xf32>
    %c0_15 = arith.constant 0 : index
    %c0_16 = arith.constant 0 : index
    %c0_17 = arith.constant 0 : index
    %c0_18 = arith.constant 0 : index
    %90 = vector.load %arg3[%c0_15, %c0_16, %c0_17, %c0_18] : memref<2x2x4x128xf32, #tpu.memory_space<vmem>>, vector<1x2x4x128xf32>
    %91 = vector.shape_cast %90 : vector<1x2x4x128xf32> to vector<2x4x128xf32>
    %92 = vector.shape_cast %81 : vector<2x4x128xf32> to vector<1x2x4x128xf32>
    tpu.vector_store %arg3[%c0_15, %c0_16, %c0_17, %c0_18], %92 {strides = array<i32>} : memref<2x2x4x128xf32, #tpu.memory_space<vmem>>, vector<1x2x4x128xf32>,
    %c1_19 = arith.constant 1 : index
    %c0_20 = arith.constant 0 : index
    %c0_21 = arith.constant 0 : index
    %c0_22 = arith.constant 0 : index
    %93 = vector.load %arg3[%c1_19, %c0_20, %c0_21, %c0_22] : memref<2x2x4x128xf32, #tpu.memory_space<vmem>>, vector<1x2x4x128xf32>
    %94 = vector.shape_cast %93 : vector<1x2x4x128xf32> to vector<2x4x128xf32>
    %95 = vector.shape_cast %89 : vector<2x4x128xf32> to vector<1x2x4x128xf32>
    tpu.vector_store %arg3[%c1_19, %c0_20, %c0_21, %c0_22], %95 {strides = array<i32>} : memref<2x2x4x128xf32, #tpu.memory_space<vmem>>, vector<1x2x4x128xf32>,
    return
  }
  func.func @transform_0(%arg0: i32) -> (i32, i32, i32, i32) {
    %c0_i32 = arith.constant 0 : i32
    %c0_i32_0 = arith.constant 0 : i32
    %c0_i32_1 = arith.constant 0 : i32
    %c0_i32_2 = arith.constant 0 : i32
    return %c0_i32, %c0_i32_0, %c0_i32_1, %arg0 : i32, i32, i32, i32
  }
  func.func @transform_1(%arg0: i32) -> (i32, i32, i32, i32) {
    %c0_i32 = arith.constant 0 : i32
    %c0_i32_0 = arith.constant 0 : i32
    %c0_i32_1 = arith.constant 0 : i32
    %c0_i32_2 = arith.constant 0 : i32
    return %c0_i32, %c0_i32_0, %c0_i32_1, %arg0 : i32, i32, i32, i32
  }
  func.func @transform_2(%arg0: i32) -> (i32, i32, i32, i32) {
    %c0_i32 = arith.constant 0 : i32
    %c0_i32_0 = arith.constant 0 : i32
    %c0_i32_1 = arith.constant 0 : i32
    %c0_i32_2 = arith.constant 0 : i32
    return %c0_i32, %c0_i32_0, %c0_i32_1, %arg0 : i32, i32, i32, i32
  }
}

</mosaic_0001>

<llo_original>
// kernel: tpu_custom_call.1
$region0: #{tpu_custom_call.1}
  #allocation0 [shape = 'u32[]', space=smem, size = 0x4, offset = 0x4, fixed_abs, tag = 'smem constant byte address 0x4 - core index']
  #allocation1 [shape = 'u32[144,128]{1,0:T(1,128)}', space=vmem, size = 0x12000, scoped, tag = 'internal scratch']
  %s0 = inlined_call_operand.hbm [shape: f32[2,2,4,128], index: 0, kind: input, shape index: {}]
  %s1 = inlined_call_operand.hbm [shape: f32[2,4,4,128], index: 1, kind: input, shape index: {}]
  %s2 = inlined_call_operand.hbm [shape: f32[2,2,4,128], index: 2, kind: output, shape index: {}]
  %s3 = sld [smem:[#allocation0]]
  $region26: #{tpu_custom_call.1} parent=0
    _
  %s5 = ssub.s32 1, %s3
  %s6 = scalar_select 0, %s5, %s3
  $region1: #{tpu_custom_call.1} parent=0
    #allocation2 [shape = 'u8[8192]{0}', space=vmem, size = 0x2000, scoped, tag = 'input window, operand 0, single buffered']
    #allocation3 [shape = 's32[1]{0}', space=sflag, size = 0x4, scoped, tag = 'scoped memory for tpu_custom_call.1']
    #allocation4 [shape = 's32[1]{0}', space=sflag, size = 0x4, scoped, tag = 'scoped memory for tpu_custom_call.1']
    #allocation5 [shape = 'u8[16384]{0}', space=vmem, size = 0x4000, scoped, tag = 'input window, operand 1, single buffered']
    #allocation6 [shape = 's32[1]{0}', space=sflag, size = 0x4, scoped, tag = 'scoped memory for tpu_custom_call.1']
    #allocation7 [shape = 'u8[8192]{0}', space=vmem, size = 0x2000, scoped, tag = 'output window, operand 0, single buffered']
    %7 = vsyncpa [#allocation3], 0
    %8 = vsyncpa [#allocation6], 0
    %9 = vsyncpa [#allocation4], 0
    // Predicated region
    $region2: #{tpu_custom_call.1} parent=1 // pred_check
      _
    $region3: #{tpu_custom_call.1} parent=1 // pred_check_branch
      %11 = sbr.rel (0) target = $region5
    $region4: #{tpu_custom_call.1} parent=1 // pred_region
      %s13 = ssub.s32 256, 256
      %14 = vsyncadd [#allocation3], %s13
      %s15 = sshll.u32 [#allocation2], 4
      %s16 = int_to_ptr.vmem [resolvable:$true] %s15
      %21 = dma.hbm_to_vmem [thread:$0]  %s0, 256, %s16, [#allocation3], 64, 64, 4
    $region5: #{tpu_custom_call.1} parent=1 // pred_fallthru
      _
    // Predicated region
    $region6: #{tpu_custom_call.1} parent=1 // pred_check
      _
    $region7: #{tpu_custom_call.1} parent=1 // pred_check_branch
      %23 = sbr.rel (0) target = $region9
    $region8: #{tpu_custom_call.1} parent=1 // pred_region
      %s25 = ssub.s32 512, 512
      %26 = vsyncadd [#allocation6], %s25
      %s27 = sshll.u32 [#allocation5], 4
      %s28 = int_to_ptr.vmem [resolvable:$true] %s27
      %33 = dma.hbm_to_vmem [thread:$0]  %s1, 512, %s28, [#allocation6], 64, 64, 4
    $region9: #{tpu_custom_call.1} parent=1 // pred_fallthru
      _
    // Predicated region
    $region10: #{tpu_custom_call.1} parent=1 // pred_check
      _
    $region11: #{tpu_custom_call.1} parent=1 // pred_check_branch
      %35 = sbr.rel (0) target = $region13
    $region12: #{tpu_custom_call.1} parent=1 // pred_region
      %36 = dma.done [#allocation3], 256
    $region13: #{tpu_custom_call.1} parent=1 // pred_fallthru
      _
    // Predicated region
    $region14: #{tpu_custom_call.1} parent=1 // pred_check
      _
    $region15: #{tpu_custom_call.1} parent=1 // pred_check_branch
      %38 = sbr.rel (0) target = $region17
    $region16: #{tpu_custom_call.1} parent=1 // pred_region
      %39 = dma.done [#allocation6], 512
    $region17: #{tpu_custom_call.1} parent=1 // pred_fallthru
      _
    %v40 = vld [vmem:[#allocation2] sm:$0xf]
    %v41 = vld [vmem:[#allocation2 + $0x4] sm:$0xf]
    %s42 = scalar_lea.vmem [#allocation2], 8
    %v43 = vld [vmem:[%s42] sm:$0xf]
    %v44 = vld [vmem:[%s42 + $0x4] sm:$0xf]
    %v45 = vld [vmem:[#allocation5] sm:$0xf]
    %v46 = vld [vmem:[#allocation5 + $0x4] sm:$0xf]
    %v47 = vld [vmem:[#allocation5 + $0x8] sm:$0xf]
    %v48 = vld [vmem:[#allocation5 + $0xc] sm:$0xf]
    %s49 = scalar_lea.vmem [#allocation5], 16
    %v50 = vld [vmem:[%s49] sm:$0xf]
    %v51 = vld [vmem:[%s49 + $0x4] sm:$0xf]
    %v52 = vld [vmem:[%s49 + $0x8] sm:$0xf]
    %v53 = vld [vmem:[%s49 + $0xc] sm:$0xf]
    %v54 = vlaneseq
    %v55 = vshrl.u32 %v54, 7
    %v56 = vsub.s32 0, %v55
    %v57 = vrot.slane %v40, %v56
    %v58 = vlaneseq
    %v59 = vshrl.u32 %v58, 7
    %v60 = vsub.s32 0, %v59
    %v61 = vrot.slane %v41, %v60
    %v62 = vmul.f32 %v57, %v45
    %v63 = vmul.f32 %v61, %v45
    %v64 = vadd.f32 %v62, 0.0
    %v65 = vadd.f32 %v63, 0.0
    %v66 = vlaneseq
    %v67 = vshrl.u32 %v66, 7
    %v68 = vsub.s32 0, %v67
    %v69 = vrot.slane %v43, %v68
    %v70 = vlaneseq
    %v71 = vshrl.u32 %v70, 7
    %v72 = vsub.s32 0, %v71
    %v73 = vrot.slane %v44, %v72
    %v74 = vmul.f32 %v69, %v50
    %v75 = vmul.f32 %v73, %v50
    %v76 = vsub.f32 %v64, %v74
    %v77 = vsub.f32 %v65, %v75
    %v78 = vmul.f32 %v57, %v50
    %v79 = vmul.f32 %v61, %v50
    %v80 = vadd.f32 %v78, 0.0
    %v81 = vadd.f32 %v79, 0.0
    %v82 = vmul.f32 %v69, %v45
    %v83 = vmul.f32 %v73, %v45
    %v84 = vadd.f32 %v80, %v82
    %v85 = vadd.f32 %v81, %v83
    %v86 = vlaneseq
    %v87 = vshrl.u32 %v86, 7
    %v88 = vsub.s32 1, %v87
    %v89 = vrot.slane %v40, %v88
    %v90 = vlaneseq
    %v91 = vshrl.u32 %v90, 7
    %v92 = vsub.s32 1, %v91
    %v93 = vrot.slane %v41, %v92
    %v94 = vmul.f32 %v89, %v46
    %v95 = vmul.f32 %v93, %v46
    %v96 = vadd.f32 %v76, %v94
    %v97 = vadd.f32 %v77, %v95
    %v98 = vlaneseq
    %v99 = vshrl.u32 %v98, 7
    %v100 = vsub.s32 1, %v99
    %v101 = vrot.slane %v43, %v100
    %v102 = vlaneseq
    %v103 = vshrl.u32 %v102, 7
    %v104 = vsub.s32 1, %v103
    %v105 = vrot.slane %v44, %v104
    %v106 = vmul.f32 %v101, %v51
    %v107 = vmul.f32 %v105, %v51
    %v108 = vsub.f32 %v96, %v106
    %v109 = vsub.f32 %v97, %v107
    %v110 = vmul.f32 %v89, %v51
    %v111 = vmul.f32 %v93, %v51
    %v112 = vadd.f32 %v84, %v110
    %v113 = vadd.f32 %v85, %v111
    %v114 = vmul.f32 %v101, %v46
    %v115 = vmul.f32 %v105, %v46
    %v116 = vadd.f32 %v112, %v114
    %v117 = vadd.f32 %v113, %v115
    %v118 = vlaneseq
    %v119 = vshrl.u32 %v118, 7
    %v120 = vsub.s32 2, %v119
    %v121 = vrot.slane %v40, %v120
    %v122 = vlaneseq
    %v123 = vshrl.u32 %v122, 7
    %v124 = vsub.s32 2, %v123
    %v125 = vrot.slane %v41, %v124
    %v126 = vmul.f32 %v121, %v47
    %v127 = vmul.f32 %v125, %v47
    %v128 = vadd.f32 %v108, %v126
    %v129 = vadd.f32 %v109, %v127
    %v130 = vlaneseq
    %v131 = vshrl.u32 %v130, 7
    %v132 = vsub.s32 2, %v131
    %v133 = vrot.slane %v43, %v132
    %v134 = vlaneseq
    %v135 = vshrl.u32 %v134, 7
    %v136 = vsub.s32 2, %v135
    %v137 = vrot.slane %v44, %v136
    %v138 = vmul.f32 %v133, %v52
    %v139 = vmul.f32 %v137, %v52
    %v140 = vsub.f32 %v128, %v138
    %v141 = vsub.f32 %v129, %v139
    %v142 = vmul.f32 %v121, %v52
    %v143 = vmul.f32 %v125, %v52
    %v144 = vadd.f32 %v116, %v142
    %v145 = vadd.f32 %v117, %v143
    %v146 = vmul.f32 %v133, %v47
    %v147 = vmul.f32 %v137, %v47
    %v148 = vadd.f32 %v144, %v146
    %v149 = vadd.f32 %v145, %v147
    %v150 = vlaneseq
    %v151 = vshrl.u32 %v150, 7
    %v152 = vsub.s32 3, %v151
    %v153 = vrot.slane %v40, %v152
    %v154 = vlaneseq
    %v155 = vshrl.u32 %v154, 7
    %v156 = vsub.s32 3, %v155
    %v157 = vrot.slane %v41, %v156
    %v158 = vmul.f32 %v153, %v48
    %v159 = vmul.f32 %v157, %v48
    %v160 = vadd.f32 %v140, %v158
    %v161 = vadd.f32 %v141, %v159
    %v162 = vlaneseq
    %v163 = vshrl.u32 %v162, 7
    %v164 = vsub.s32 3, %v163
    %v165 = vrot.slane %v43, %v164
    %v166 = vlaneseq
    %v167 = vshrl.u32 %v166, 7
    %v168 = vsub.s32 3, %v167
    %v169 = vrot.slane %v44, %v168
    %v170 = vmul.f32 %v165, %v53
    %v171 = vmul.f32 %v169, %v53
    %v172 = vsub.f32 %v160, %v170
    %v173 = vsub.f32 %v161, %v171
    %v174 = vmul.f32 %v153, %v53
    %v175 = vmul.f32 %v157, %v53
    %v176 = vadd.f32 %v148, %v174
    %v177 = vadd.f32 %v149, %v175
    %v178 = vmul.f32 %v165, %v48
    %v179 = vmul.f32 %v169, %v48
    %v180 = vadd.f32 %v176, %v178
    %v181 = vadd.f32 %v177, %v179
    %182 = vst [vmem:[#allocation7] sm:$0xf] %v172
    %183 = vst [vmem:[#allocation7 + $0x4] sm:$0xf] %v173
    %s184 = scalar_lea.vmem [#allocation7], 8
    %185 = vst [vmem:[%s184] sm:$0xf] %v180
    %186 = vst [vmem:[%s184 + $0x4] sm:$0xf] %v181
    // Predicated region
    $region18: #{tpu_custom_call.1} parent=1 // pred_check
      _
    $region19: #{tpu_custom_call.1} parent=1 // pred_check_branch
      %188 = sbr.rel (0) target = $region21
    $region20: #{tpu_custom_call.1} parent=1 // pred_region
      %s190 = ssub.s32 256, 256
      %191 = vsyncadd [#allocation4], %s190
      %s192 = sshll.u32 [#allocation7], 4
      %s193 = int_to_ptr.vmem [resolvable:$true] %s192
      %198 = dma.vmem_to_hbm [thread:$0]  %s193, 256, %s2, [#allocation4], 64, 64, 4
    $region21: #{tpu_custom_call.1} parent=1 // pred_fallthru
      _
    // Predicated region
    $region22: #{tpu_custom_call.1} parent=1 // pred_check
      _
    $region23: #{tpu_custom_call.1} parent=1 // pred_check_branch
      %200 = sbr.rel (0) target = $region25
    $region24: #{tpu_custom_call.1} parent=1 // pred_region
      %201 = dma.done [#allocation4], 256
    $region25: #{tpu_custom_call.1} parent=1 // pred_fallthru
      _
    %202 = vsyncpa [#allocation3], 1
    %203 = vsyncpa [#allocation6], 1
    %204 = vsyncpa [#allocation4], 1

</llo_original>
